<compile_context>
chip_gen: v5e
topology: v5e:2x2
jax: 0.10.0
libtpu: 0.0.40
codegen_flags: <defaults>
</compile_context>

<pallas_src>
import math

import jax
import jax.numpy as jnp
from jax.experimental import pallas as pl
from jax.experimental.pallas import tpu as pltpu


_LANES = 128      # TPU lane width: pad the 2-wide output dim to a dense slab.
_SUBLANES = 8     # sublane granularity for the batch (second-to-last) dim.


def _round_up(x, m):
    return ((x + m - 1) // m) * m


def _nsp_kernel(x_ref, w_ref, b_ref, o_ref):
    # x_ref: (TB, H)   -- streamed per grid step (double-buffered by Pallas)
    # w_ref: (H, 128)  -- resident; columns >= 2 are zero
    # b_ref: (1, 128)  -- resident; columns >= 2 are zero
    # o_ref: (TB, 128) -- lane-dense store, unmasked vst
    acc = jnp.dot(x_ref[...], w_ref[...], preferred_element_type=jnp.float32)
    o_ref[...] = (acc + b_ref[...]).astype(o_ref.dtype)


def nsp_forward(cls_x, weight, bias, *, block_batch=None, compute_dtype=None):
    """NSP head forward: cls_x @ weight.T + bias.

    cls_x:  (B, H)
    weight: (2, H)   (PyTorch nn.Linear layout)
    bias:   (2,)
    compute_dtype: e.g. jnp.bfloat16 to halve HBM read traffic (f32 accumulate).
    """
    B, H = cls_x.shape
    out_features = weight.shape[0]
    out_dtype = cls_x.dtype

    x = cls_x
    if compute_dtype is not None:
        x = x.astype(compute_dtype)
        weight = weight.astype(compute_dtype)

    # Batch tile: large tiles approach the HBM roofline; cap so that
    # 2 (double-buffer) * TB * H * itemsize stays well inside the smallest
    # (v5e, 16 MiB) default scoped VMEM.
    if block_batch is None:
        itemsize = jnp.dtype(x.dtype).itemsize
        vmem_budget = 8 * 1024 * 1024                       # input-buffer budget
        tb_cap = max(_SUBLANES, vmem_budget // (2 * H * itemsize))
        block_batch = int(min(1024, tb_cap))
    tb = _round_up(min(block_batch, max(B, 1)), _SUBLANES)

    # Pad batch to a tile multiple; pad the tiny output dim to a full lane width.
    b_pad = _round_up(B, tb)
    n_pad = _LANES
    if b_pad != B:
        x = jnp.pad(x, ((0, b_pad - B), (0, 0)))

    # Kernel-friendly, lane-dense parameter layouts (hoist these outside a jit'd
    # step in real use; they are tiny).
    w_t = jnp.zeros((H, n_pad), x.dtype).at[:, :out_features].set(
        weight.T.astype(x.dtype))
    b2d = jnp.zeros((1, n_pad), jnp.float32).at[:, :out_features].set(
        bias.astype(jnp.float32))

    grid = (b_pad // tb,)
    out = pl.pallas_call(
        _nsp_kernel,
        out_shape=jax.ShapeDtypeStruct((b_pad, n_pad), out_dtype),
        grid=grid,
        in_specs=[
            pl.BlockSpec((tb, H), lambda i: (i, 0)),        # activations: streamed
            pl.BlockSpec((H, n_pad), lambda i: (0, 0)),     # weight: resident
            pl.BlockSpec((1, n_pad), lambda i: (0, 0)),     # bias:   resident
        ],
        out_specs=pl.BlockSpec((tb, n_pad), lambda i: (i, 0)),
        compiler_params=pltpu.CompilerParams(
            # One independent batch axis -> shard across v7x's two TensorCores.
            dimension_semantics=("parallel",),
        ),
    )(x, w_t, b2d)

    # TODO(synk): for truly tiny B*H this op is pure launch overhead; at a real
    # call site dispatch to plain XLA (or fuse into the pooler) below a size
    # threshold instead of always taking the Pallas path.
    return out[:B, :out_features]


def init_nsp_params(key, hidden, out_features=2):
    """Deterministic init mirroring nn.Linear's default (kaiming-uniform-ish)."""
    kw, kb = jax.random.split(key)
    bound = 1.0 / math.sqrt(hidden)
    weight = jax.random.uniform(kw, (out_features, hidden), jnp.float32,
                                minval=-bound, maxval=bound)
    bias = jax.random.uniform(kb, (out_features,), jnp.float32,
                              minval=-bound, maxval=bound)
    return weight, bias


if __name__ == "__main__":
    key = jax.random.PRNGKey(0)
    k_x, k_p = jax.random.split(key)

    batch, hidden = 2, 32
    cls_x = jax.random.normal(k_x, (batch, hidden), jnp.float32)
    weight, bias = init_nsp_params(k_p, hidden, 2)

    out = nsp_forward(cls_x, weight, bias)
    out = jax.block_until_ready(out)

    # Cross-check against plain JAX reference of the PyTorch forward.
    ref = cls_x @ weight.T + bias
    assert out.shape == (batch, 2)
    assert jnp.allclose(out, ref, atol=1e-5, rtol=1e-5)

    # Also exercise the gridded path with a larger, non-tile-multiple batch.
    k_x2 = jax.random.PRNGKey(1)
    big_b, big_h = 600, 256
    big_x = jax.random.normal(k_x2, (big_b, big_h), jnp.float32)
    big_w, big_bi = init_nsp_params(jax.random.PRNGKey(2), big_h, 2)
    big_out = jax.block_until_ready(
        nsp_forward(big_x, big_w, big_bi, block_batch=512))
    big_ref = big_x @ big_w.T + big_bi
    assert big_out.shape == (big_b, 2)
    assert jnp.allclose(big_out, big_ref, atol=1e-4, rtol=1e-4)

    print("KERNEL_OK")
</pallas_src>

<mosaic_0001>
module attributes {stable_mosaic.version = 11 : i64} {
  func.func @_nsp_kernel(%arg0: i32, %arg1: memref<8x32xf32, #tpu.memory_space<vmem>>, %arg2: memref<32x128xf32, #tpu.memory_space<vmem>>, %arg3: memref<1x128xf32, #tpu.memory_space<vmem>>, %arg4: memref<8x128xf32, #tpu.memory_space<vmem>>) attributes {dimension_semantics = [#tpu.dimension_semantics<parallel>], iteration_bounds = array<i64: 1>, scalar_prefetch = 0 : i64, scratch_operands = 0 : i64, tpu.core_type = #tpu.core_type<tc>, window_params = [{transform_indices = @transform_0, window_bounds = array<i64: 8, 32>}, {pipeline_mode = #tpu.pipeline_mode<synchronous>, transform_indices = @transform_1, window_bounds = array<i64: 32, 128>}, {pipeline_mode = #tpu.pipeline_mode<synchronous>, transform_indices = @transform_2, window_bounds = array<i64: 1, 128>}, {transform_indices = @transform_3, window_bounds = array<i64: 8, 128>}]} {
    %c0 = arith.constant 0 : index
    %c0_0 = arith.constant 0 : index
    %0 = vector.load %arg1[%c0, %c0_0] : memref<8x32xf32, #tpu.memory_space<vmem>>, vector<8x32xf32>
    %c0_1 = arith.constant 0 : index
    %c0_2 = arith.constant 0 : index
    %1 = vector.load %arg2[%c0_1, %c0_2] : memref<32x128xf32, #tpu.memory_space<vmem>>, vector<32x128xf32>
    %cst = arith.constant dense<0.000000e+00> : vector<8x128xf32>
    %2 = tpu.matmul %0, %1, %cst {dimension_numbers = #tpu.dot_dimension_numbers<[1], [0], [0], [1], [0, 0, 1, 1], [], []>} : vector<8x32xf32>, vector<32x128xf32>, vector<8x128xf32> -> vector<8x128xf32>
    %c0_3 = arith.constant 0 : index
    %c0_4 = arith.constant 0 : index
    %3 = vector.load %arg3[%c0_3, %c0_4] : memref<1x128xf32, #tpu.memory_space<vmem>>, vector<1x128xf32>
    %4 = vector.broadcast %3 : vector<1x128xf32> to vector<8x128xf32>
    %5 = arith.addf %2, %4 : vector<8x128xf32>
    %c0_5 = arith.constant 0 : index
    %c0_6 = arith.constant 0 : index
    %6 = vector.load %arg4[%c0_5, %c0_6] : memref<8x128xf32, #tpu.memory_space<vmem>>, vector<8x128xf32>
    tpu.vector_store %arg4[%c0_5, %c0_6], %5 {strides = array<i32>} : memref<8x128xf32, #tpu.memory_space<vmem>>, vector<8x128xf32>,
    return
  }
  func.func @transform_0(%arg0: i32) -> (i32, i32) {
    %c0_i32 = arith.constant 0 : i32
    %c0_i32_0 = arith.constant 0 : i32
    return %arg0, %c0_i32 : i32, i32
  }
  func.func @transform_1(%arg0: i32) -> (i32, i32) {
    %c0_i32 = arith.constant 0 : i32
    %c0_i32_0 = arith.constant 0 : i32
    %c0_i32_1 = arith.constant 0 : i32
    return %c0_i32, %c0_i32_0 : i32, i32
  }
  func.func @transform_2(%arg0: i32) -> (i32, i32) {
    %c0_i32 = arith.constant 0 : i32
    %c0_i32_0 = arith.constant 0 : i32
    %c0_i32_1 = arith.constant 0 : i32
    return %c0_i32, %c0_i32_0 : i32, i32
  }
  func.func @transform_3(%arg0: i32) -> (i32, i32) {
    %c0_i32 = arith.constant 0 : i32
    %c0_i32_0 = arith.constant 0 : i32
    return %arg0, %c0_i32 : i32, i32
  }
}

</mosaic_0001>

<llo_original>
// kernel: tpu_custom_call.1
$region0: #{tpu_custom_call.1}
  #allocation0 [shape = 'u32[]', space=smem, size = 0x4, offset = 0x4, fixed_abs, tag = 'smem constant byte address 0x4 - core index']
  #allocation1 [shape = 'u32[72,128]{1,0:T(1,128)}', space=vmem, size = 0x9000, scoped, tag = 'internal scratch']
  %s0 = inlined_call_operand.hbm [shape: f32[8,32], index: 0, kind: input, shape index: {}]
  %s1 = inlined_call_operand.hbm [shape: f32[32,128], index: 1, kind: input, shape index: {}]
  %s2 = inlined_call_operand.vmem [shape: f32[1,128], index: 2, kind: input, shape index: {}]
  %s3 = inlined_call_operand.hbm [shape: f32[8,128], index: 3, kind: output, shape index: {}]
  %s4 = sld [smem:[#allocation0]]
  $region30: #{tpu_custom_call.1} parent=0
    _
  %s6 = ssub.s32 1, %s4
  %s7 = scalar_select 0, %s6, %s4
  $region1: #{tpu_custom_call.1} parent=0
    #allocation2 [shape = 'u8[4096]{0}', space=vmem, size = 0x1000, scoped, tag = 'input window, operand 0, single buffered']
    #allocation3 [shape = 's32[1]{0}', space=sflag, size = 0x4, scoped, tag = 'scoped memory for tpu_custom_call.1']
    #allocation4 [shape = 's32[1]{0}', space=sflag, size = 0x4, scoped, tag = 'scoped memory for tpu_custom_call.1']
    #allocation5 [shape = 'u8[16384]{0}', space=vmem, size = 0x4000, scoped, tag = 'input window, operand 1, single buffered']
    #allocation6 [shape = 's32[1]{0}', space=sflag, size = 0x4, scoped, tag = 'scoped memory for tpu_custom_call.1']
    #allocation7 [shape = 'u8[4096]{0}', space=vmem, size = 0x1000, scoped, tag = 'output window, operand 0, single buffered']
    %8 = vsyncpa [#allocation3], 0
    %9 = vsyncpa [#allocation6], 0
    %10 = vsyncpa [#allocation4], 0
    // Predicated region
    $region2: #{tpu_custom_call.1} parent=1 // pred_check
      _
    $region3: #{tpu_custom_call.1} parent=1 // pred_check_branch
      %12 = sbr.rel (0) target = $region5
    $region4: #{tpu_custom_call.1} parent=1 // pred_region
      %14 = vsyncadd [#allocation3], 0
      %s16 = sshll.u32 %s0, 4
      %s17 = int_to_ptr.hbm [resolvable:$true] %s16
      %s18 = sshll.u32 [#allocation2], 4
      %s19 = int_to_ptr.vmem [resolvable:$true] %s18
      %21 = dma.hbm_to_vmem [thread:$0]  %s17, 128, %s19, [#allocation3]
    $region5: #{tpu_custom_call.1} parent=1 // pred_fallthru
      _
    // Predicated region
    $region6: #{tpu_custom_call.1} parent=1 // pred_check
      _
    $region7: #{tpu_custom_call.1} parent=1 // pred_check_branch
      %23 = sbr.rel (0) target = $region9
    $region8: #{tpu_custom_call.1} parent=1 // pred_region
      %25 = vsyncadd [#allocation6], 0
      %s26 = sshll.u32 %s1, 4
      %s27 = int_to_ptr.hbm [resolvable:$true] %s26
      %s28 = sshll.u32 [#allocation5], 4
      %s29 = int_to_ptr.vmem [resolvable:$true] %s28
      %34 = dma.hbm_to_vmem [thread:$0]  %s27, 512, %s29, [#allocation6], 128, 128, 8
    $region9: #{tpu_custom_call.1} parent=1 // pred_fallthru
      _
    // Predicated region
    $region10: #{tpu_custom_call.1} parent=1 // pred_check
      _
    $region11: #{tpu_custom_call.1} parent=1 // pred_check_branch
      %36 = sbr.rel (0) target = $region13
    $region12: #{tpu_custom_call.1} parent=1 // pred_region
      _
    $region13: #{tpu_custom_call.1} parent=1 // pred_fallthru
      _
    // Predicated region
    $region14: #{tpu_custom_call.1} parent=1 // pred_check
      _
    $region15: #{tpu_custom_call.1} parent=1 // pred_check_branch
      %38 = sbr.rel (0) target = $region17
    $region16: #{tpu_custom_call.1} parent=1 // pred_region
      %40 = dma.done [#allocation3], 128
    $region17: #{tpu_custom_call.1} parent=1 // pred_fallthru
      _
    // Predicated region
    $region18: #{tpu_custom_call.1} parent=1 // pred_check
      _
    $region19: #{tpu_custom_call.1} parent=1 // pred_check_branch
      %42 = sbr.rel (0) target = $region21
    $region20: #{tpu_custom_call.1} parent=1 // pred_region
      %44 = dma.done [#allocation6], 512
    $region21: #{tpu_custom_call.1} parent=1 // pred_fallthru
      _
    %v45 = vld [vmem:[#allocation2] sm:$0xff]
    %v46 = vld [vmem:[#allocation5] sm:$0xff]
    %v47 = vld [vmem:[#allocation5 + $0x8] sm:$0xff]
    %v48 = vld [vmem:[#allocation5 + $0x10] sm:$0xff]
    %v49 = vld [vmem:[#allocation5 + $0x18] sm:$0xff]
    %v50 = vld [vmem:[%s2] sm:$0x1]
    %v52 = vperm.slane %v50, 0
    %vm54 = vcmask 261120
    %v56 = vsel %vm54, %v45, 0
    %58 = vmatpush.msra.mxu0 0.0
    %59 = vmatpush.msra.mxu0 0.0
    %60 = vmatpush.msra.mxu0 0.0
    %61 = vmatpush.msra.mxu0 0.0
    %62 = vmatpush.msra.mxu0 0.0
    %63 = vmatpush.msra.mxu0 0.0
    %64 = vmatpush.msra.mxu0 0.0
    %65 = vmatpush.msra.mxu0 0.0
    %66 = vmatpush.msra.mxu0 0.0
    %67 = vmatpush.msra.mxu0 0.0
    %68 = vmatpush.msra.mxu0 0.0
    %69 = vmatpush.msra.mxu0 0.0
    %70 = vmatpush.msra.mxu0 %v49
    %71 = vmatpush.msra.mxu0 %v48
    %72 = vmatpush.msra.mxu0 %v47
    %73 = vmatpush.msra.mxu0 %v46
    %74 = vmatmul.f32.gmra.mxu0 %v56
    %v75 = vpop.f32.mrf.mxu0
    %v76 = vadd.f32 %v52, %v75
    %77 = vdwg.mxu0
    %78 = vst [vmem:[#allocation7] sm:$0xff] %v76
    // Predicated region
    $region22: #{tpu_custom_call.1} parent=1 // pred_check
      _
    $region23: #{tpu_custom_call.1} parent=1 // pred_check_branch
      %80 = sbr.rel (0) target = $region25
    $region24: #{tpu_custom_call.1} parent=1 // pred_region
      %82 = vsyncadd [#allocation4], 0
      %s84 = sshll.u32 [#allocation7], 4
      %s85 = int_to_ptr.vmem [resolvable:$true] %s84
      %s86 = sshll.u32 %s3, 4
      %s87 = int_to_ptr.hbm [resolvable:$true] %s86
      %89 = dma.vmem_to_hbm [thread:$0]  %s85, 128, %s87, [#allocation4]
    $region25: #{tpu_custom_call.1} parent=1 // pred_fallthru
      _
    // Predicated region
    $region26: #{tpu_custom_call.1} parent=1 // pred_check
      _
    $region27: #{tpu_custom_call.1} parent=1 // pred_check_branch
      %91 = sbr.rel (0) target = $region29
    $region28: #{tpu_custom_call.1} parent=1 // pred_region
      %93 = dma.done [#allocation4], 128
    $region29: #{tpu_custom_call.1} parent=1 // pred_fallthru
      _
    %94 = vsyncpa [#allocation3], 1
    %95 = vsyncpa [#allocation6], 1
    %96 = vsyncpa [#allocation4], 1

</llo_original>
